<compile_context>
chip_gen: v5e
topology: v5e:2x2
jax: 0.10.0
libtpu: 0.0.40
codegen_flags: <defaults>
</compile_context>

<pallas_src>
import functools

import jax
import jax.numpy as jnp
from jax import lax
from jax.experimental import pallas as pl
from jax.experimental.pallas import tpu as pltpu


def _make_divisible(ch, divisor=8, min_ch=None):
    if min_ch is None:
        min_ch = divisor
    new_ch = max(min_ch, int(ch + divisor / 2) // divisor * divisor)
    if new_ch < 0.9 * ch:
        new_ch += divisor
    return new_ch


def _round_up(v, m):
    return (v + m - 1) // m * m


_SCRATCH_VMEM = 2 << 20  # slack for mosaic-internal scratch


def _weights_vmem_bytes(c, cs):
    # Double-buffered small operands (f32): w1^T [C,Cs], b1 [1,Cs], w2^T [Cs,C],
    # b2 [1,C] — with their (8,128) VMEM padding.
    return 2 * 4 * (
        _round_up(c, 8) * _round_up(cs, 128)
        + _round_up(cs, 8) * _round_up(c, 128)
        + 8 * _round_up(cs, 128)
        + 8 * _round_up(c, 128))


def _choose_images_per_block(n, max_nb, min_steps=4):
    """Largest divisor of n that fits the budget, preferring >= min_steps grid
    steps (pipelining + v7x megacore) and an even step count."""
    max_nb = int(max(1, min(n, max_nb)))
    divisors = [d for d in range(1, n + 1) if n % d == 0 and d <= max_nb]
    want_steps = min(min_steps, n)
    pool = [d for d in divisors if n // d >= want_steps] or divisors
    even = [d for d in pool if (n // d) % 2 == 0]
    pool = even or pool
    return max(pool)


# ---------------------------------------------------------------------------
# Fused path: whole image(s) resident per grid step (single HBM read + write).
# ---------------------------------------------------------------------------
def _se_fused_kernel(x_ref, w1t_ref, b1_ref, w2t_ref, b2_ref, o_ref, *, inv_hw):
    # Global average pool over the spatial lanes (true HW, no padding needed).
    pooled = jnp.sum(x_ref[...], axis=-1) * inv_hw                      # [NB, C]
    # fc1 (1x1 conv == linear), batched over the NB images of this block.
    h = jnp.dot(pooled, w1t_ref[...],
                preferred_element_type=jnp.float32) + b1_ref[...]       # [NB, Cs]
    h = jnp.maximum(h, 0.0)                                             # ReLU
    # fc2, batched.
    s = jnp.dot(h, w2t_ref[...],
                preferred_element_type=jnp.float32) + b2_ref[...]       # [NB, C]
    # hardsigmoid: clip((s + 3) / 6, 0, 1)
    scale = jnp.clip((s + 3.0) * (1.0 / 6.0), 0.0, 1.0)                 # [NB, C]
    # Re-read the Ref (data already in VMEM) instead of reusing the value bound
    # above — avoids holding an extra block-sized temporary live in VMEM.
    o_ref[...] = (x_ref[...] * scale[:, :, None]).astype(o_ref.dtype)


# ---------------------------------------------------------------------------
# Split-HW fallback: pass 1 computes the per-image scale over HW chunks
# (accumulator + pl.when finalize), pass 2 streams scale * x.
# ---------------------------------------------------------------------------
def _se_scale_kernel(x_ref, w1t_ref, b1_ref, w2t_ref, b2_ref, scale_ref,
                     acc_ref, *, hw, chunk, inv_hw):
    j = pl.program_id(1)

    @pl.when(j == 0)
    def _():
        acc_ref[...] = jnp.zeros_like(acc_ref)

    xv = x_ref[...]                                                # [1, C, chunk]
    # Last chunk may extend past the true HW (clipped DMA leaves garbage lanes);
    # mask them out of the pooled sum.
    lane = lax.broadcasted_iota(jnp.int32, xv.shape, 2)
    xv = jnp.where(j * chunk + lane < hw, xv, 0.0)
    acc_ref[...] += jnp.sum(xv, axis=-1)                           # [1, C]

    @pl.when(j == pl.num_programs(1) - 1)
    def _():
        pooled = acc_ref[...] * inv_hw                             # [1, C]
        h = jnp.dot(pooled, w1t_ref[...],
                    preferred_element_type=jnp.float32) + b1_ref[...]
        h = jnp.maximum(h, 0.0)
        s = jnp.dot(h, w2t_ref[...],
                    preferred_element_type=jnp.float32) + b2_ref[...]
        scale_ref[...] = jnp.clip((s + 3.0) * (1.0 / 6.0), 0.0, 1.0)[:, :, None]


def _se_apply_kernel(x_ref, scale_ref, o_ref):
    # x: [1, C, chunk], scale: [1, C, 1] -> broadcast multiply over lanes.
    o_ref[...] = (x_ref[...] * scale_ref[...]).astype(o_ref.dtype)


def _se_split_hw(x_flat, w1_t, b1_row, w2_t, b2_row, *, vmem_cap_bytes,
                 chunk=None):
    N, C, HW = x_flat.shape
    Cs = w1_t.shape[1]
    itemsize = x_flat.dtype.itemsize
    c_pad = _round_up(C, 8)
    weight_vmem = _weights_vmem_bytes(C, Cs)

    if chunk is None:
        budget = max(vmem_cap_bytes - weight_vmem - _SCRATCH_VMEM,
                     4 * c_pad * 128 * itemsize)
        chunk = (budget // (4 * c_pad * itemsize)) // 128 * 128
    chunk = int(max(128, min(chunk, _round_up(HW, 128))))
    n_chunks = int(pl.cdiv(HW, chunk))

    chunk_vmem = c_pad * chunk * itemsize
    vmem_limit = int(min(max(4 * chunk_vmem + weight_vmem + _SCRATCH_VMEM,
                             32 << 20), vmem_cap_bytes))

    # Pass 1: per-image scale [N, C, 1].
    scale = pl.pallas_call(
        functools.partial(_se_scale_kernel, hw=HW, chunk=chunk, inv_hw=1.0 / HW),
        out_shape=jax.ShapeDtypeStruct((N, C, 1), jnp.float32),
        grid_spec=pltpu.PrefetchScalarGridSpec(
            num_scalar_prefetch=0,
            grid=(N, n_chunks),
            in_specs=[
                pl.BlockSpec((1, C, chunk), lambda n, j: (n, 0, j)),   # x
                pl.BlockSpec((C, Cs), lambda n, j: (0, 0)),            # w1^T
                pl.BlockSpec((1, Cs), lambda n, j: (0, 0)),            # b1
                pl.BlockSpec((Cs, C), lambda n, j: (0, 0)),            # w2^T
                pl.BlockSpec((1, C), lambda n, j: (0, 0)),             # b2
            ],
            out_specs=pl.BlockSpec((1, C, 1), lambda n, j: (n, 0, 0)),
            scratch_shapes=[pltpu.VMEM((1, C), jnp.float32)],
        ),
        compiler_params=pltpu.CompilerParams(
            dimension_semantics=("parallel", "arbitrary"),
            vmem_limit_bytes=vmem_limit,
        ),
    )(x_flat, w1_t, b1_row, w2_t, b2_row)

    # Pass 2: out = scale * x, streamed over HW chunks.
    out_flat = pl.pallas_call(
        _se_apply_kernel,
        out_shape=jax.ShapeDtypeStruct((N, C, HW), x_flat.dtype),
        grid_spec=pltpu.PrefetchScalarGridSpec(
            num_scalar_prefetch=0,
            grid=(N, n_chunks),
            in_specs=[
                pl.BlockSpec((1, C, chunk), lambda n, j: (n, 0, j)),   # x
                pl.BlockSpec((1, C, 1), lambda n, j: (n, 0, 0)),       # scale
            ],
            out_specs=pl.BlockSpec((1, C, chunk), lambda n, j: (n, 0, j)),
        ),
        compiler_params=pltpu.CompilerParams(
            dimension_semantics=("parallel", "parallel"),
            vmem_limit_bytes=vmem_limit,
        ),
    )(x_flat, scale)

    return out_flat


# ---------------------------------------------------------------------------
# Public wrapper.
# ---------------------------------------------------------------------------
def squeeze_excitation(x, w1, b1, w2, b2, *,
                       target_block_bytes=8 << 20,
                       vmem_cap_bytes=48 << 20,
                       _force_split_hw=False,
                       _split_chunk=None):
    """SE block forward.  x: [N, C, H, W]; w1: [Cs, C]; b1: [Cs];
    w2: [C, Cs]; b2: [C].  Matches PyTorch SqueezeExcitation.forward.

    NOTE: x is read and the result written once (fused path); if x is dead at
    the call site, donate it at the jit boundary (donate_argnums) to let XLA
    reuse its HBM buffer."""
    N, C, H, W = x.shape
    Cs = w1.shape[0]
    HW = H * W
    itemsize = x.dtype.itemsize

    # Channels on sublanes, flattened spatial on lanes.  No HBM-side padding.
    x_flat = x.reshape(N, C, HW)

    # Pre-transpose weights so in-kernel FCs are [NB,C]@[C,Cs] / [NB,Cs]@[Cs,C].
    w1_t = w1.T                      # [C, Cs]
    w2_t = w2.T                      # [Cs, C]
    b1_row = b1.reshape(1, Cs)
    b2_row = b2.reshape(1, C)

    # Real VMEM footprint of one image inside a block (incl. (8,128) padding of
    # the trailing dims — e.g. 2x at C=4).
    vmem_per_image = _round_up(C, 8) * _round_up(HW, 128) * itemsize
    weight_vmem = _weights_vmem_bytes(C, Cs)

    fits_fused = (4 * vmem_per_image + weight_vmem + _SCRATCH_VMEM
                  <= vmem_cap_bytes)

    if _force_split_hw or not fits_fused:
        out_flat = _se_split_hw(x_flat, w1_t, b1_row, w2_t, b2_row,
                                vmem_cap_bytes=vmem_cap_bytes,
                                chunk=_split_chunk)
        return out_flat.reshape(N, C, H, W)

    # Images per grid step: big enough to amortize the ~0.35 us per-step
    # overhead and give long contiguous DMAs, capped by the VMEM budget
    # (2 input + 2 output block buffers, default Buffered(2) pipelining).
    max_nb_budget = (vmem_cap_bytes - weight_vmem - _SCRATCH_VMEM) // (
        4 * vmem_per_image)
    max_nb = min(N,
                 max(1, target_block_bytes // vmem_per_image),
                 max(1, max_nb_budget))
    NB = _choose_images_per_block(N, max_nb)
    grid = (N // NB,)

    vmem_need = 4 * NB * vmem_per_image + weight_vmem + _SCRATCH_VMEM
    vmem_limit = int(min(max(vmem_need, 32 << 20), vmem_cap_bytes))

    out_flat = pl.pallas_call(
        functools.partial(_se_fused_kernel, inv_hw=1.0 / HW),
        out_shape=jax.ShapeDtypeStruct((N, C, HW), x.dtype),
        grid_spec=pltpu.PrefetchScalarGridSpec(
            num_scalar_prefetch=0,
            grid=grid,
            in_specs=[
                pl.BlockSpec((NB, C, HW), lambda n: (n, 0, 0)),   # x
                pl.BlockSpec((C, Cs), lambda n: (0, 0)),          # w1^T
                pl.BlockSpec((1, Cs), lambda n: (0, 0)),          # b1
                pl.BlockSpec((Cs, C), lambda n: (0, 0)),          # w2^T
                pl.BlockSpec((1, C), lambda n: (0, 0)),           # b2
            ],
            out_specs=pl.BlockSpec((NB, C, HW), lambda n: (n, 0, 0)),
        ),
        compiler_params=pltpu.CompilerParams(
            dimension_semantics=("parallel",),
            vmem_limit_bytes=vmem_limit,
        ),
    )(x_flat, w1_t, b1_row, w2_t, b2_row)

    return out_flat.reshape(N, C, H, W)


def _reference(x, w1, b1, w2, b2):
    pooled = jnp.mean(x, axis=(2, 3))                       # [N, C]
    h = jnp.maximum(pooled @ w1.T + b1, 0.0)                # [N, Cs]
    s = h @ w2.T + b2                                       # [N, C]
    scale = jnp.clip((s + 3.0) / 6.0, 0.0, 1.0)
    return x * scale[:, :, None, None]


if __name__ == "__main__":
    # Module config: input_c=4, squeeze_factor=4 -> squeeze_c = _make_divisible(1) = 8
    input_c = 4
    squeeze_c = _make_divisible(input_c // 4)

    key = jax.random.PRNGKey(0)
    kx, k1, k2, k3, k4, kx2 = jax.random.split(key, 6)

    # fc1: Conv2d(input_c, squeeze_c, 1) -> weight [Cs, C], bias [Cs]
    w1 = jax.random.normal(k1, (squeeze_c, input_c), dtype=jnp.float32) * 0.1
    b1 = jax.random.normal(k2, (squeeze_c,), dtype=jnp.float32) * 0.1
    # fc2: Conv2d(squeeze_c, input_c, 1) -> weight [C, Cs], bias [C]
    w2 = jax.random.normal(k3, (input_c, squeeze_c), dtype=jnp.float32) * 0.1
    b2 = jax.random.normal(k4, (input_c,), dtype=jnp.float32) * 0.1

    # Primary config: N=2, C=4, H=W=16 (fused path).
    x = jax.random.normal(kx, (2, input_c, 16, 16), dtype=jnp.float32)
    out = jax.block_until_ready(jax.jit(squeeze_excitation)(x, w1, b1, w2, b2))
    assert out.shape == x.shape
    assert jnp.allclose(out, _reference(x, w1, b1, w2, b2),
                        atol=1e-5, rtol=1e-5), "fused path mismatch"

    # Non-multiple-of-128 spatial size (HW=400), odd batch: still the fused
    # path, with full-dim (unpadded) trailing block dims — no HBM pad/slice.
    x2 = jax.random.normal(kx2, (3, input_c, 20, 20), dtype=jnp.float32)
    out2 = jax.block_until_ready(jax.jit(squeeze_excitation)(x2, w1, b1, w2, b2))
    assert jnp.allclose(out2, _reference(x2, w1, b1, w2, b2),
                        atol=1e-5, rtol=1e-5), "fused path (HW%128!=0) mismatch"

    # Large-image fallback (split-HW, two passes), forced at a small shape so
    # the chunked accumulation + tail masking are exercised.
    split_fn = jax.jit(functools.partial(squeeze_excitation,
                                         _force_split_hw=True, _split_chunk=128))
    out3 = jax.block_until_ready(split_fn(x2, w1, b1, w2, b2))
    assert jnp.allclose(out3, _reference(x2, w1, b1, w2, b2),
                        atol=1e-5, rtol=1e-5), "split-HW path mismatch"

    print("KERNEL_OK")
</pallas_src>

<mosaic_0001>
module attributes {stable_mosaic.version = 11 : i64} {
  func.func @_se_fused_kernel(%arg0: i32, %arg1: memref<1x4x256xf32, #tpu.memory_space<vmem>>, %arg2: memref<4x8xf32, #tpu.memory_space<vmem>>, %arg3: memref<1x8xf32, #tpu.memory_space<vmem>>, %arg4: memref<8x4xf32, #tpu.memory_space<vmem>>, %arg5: memref<1x4xf32, #tpu.memory_space<vmem>>, %arg6: memref<1x4x256xf32, #tpu.memory_space<vmem>>) attributes {dimension_semantics = [#tpu.dimension_semantics<parallel>], iteration_bounds = array<i64: 2>, scalar_prefetch = 0 : i64, scratch_operands = 0 : i64, tpu.core_type = #tpu.core_type<tc>, window_params = [{transform_indices = @transform_0, window_bounds = array<i64: 1, 4, 256>}, {pipeline_mode = #tpu.pipeline_mode<synchronous>, transform_indices = @transform_1, window_bounds = array<i64: 4, 8>}, {pipeline_mode = #tpu.pipeline_mode<synchronous>, transform_indices = @transform_2, window_bounds = array<i64: 1, 8>}, {pipeline_mode = #tpu.pipeline_mode<synchronous>, transform_indices = @transform_3, window_bounds = array<i64: 8, 4>}, {pipeline_mode = #tpu.pipeline_mode<synchronous>, transform_indices = @transform_4, window_bounds = array<i64: 1, 4>}, {transform_indices = @transform_5, window_bounds = array<i64: 1, 4, 256>}]} {
    %c0 = arith.constant 0 : index
    %c0_0 = arith.constant 0 : index
    %c0_1 = arith.constant 0 : index
    %0 = vector.load %arg1[%c0, %c0_0, %c0_1] : memref<1x4x256xf32, #tpu.memory_space<vmem>>, vector<1x4x256xf32>
    %cst = arith.constant dense<0.000000e+00> : vector<1x4xf32>
    %1 = vector.multi_reduction <add>, %0, %cst [2] : vector<1x4x256xf32> to vector<1x4xf32>
    %cst_2 = arith.constant 3.906250e-03 : f32
    %2 = vector.broadcast %cst_2 : f32 to vector<1x4xf32>
    %3 = arith.mulf %1, %2 : vector<1x4xf32>
    %c0_3 = arith.constant 0 : index
    %c0_4 = arith.constant 0 : index
    %4 = vector.load %arg2[%c0_3, %c0_4] : memref<4x8xf32, #tpu.memory_space<vmem>>, vector<4x8xf32>
    %cst_5 = arith.constant dense<0.000000e+00> : vector<1x8xf32>
    %5 = tpu.matmul %3, %4, %cst_5 {dimension_numbers = #tpu.dot_dimension_numbers<[1], [0], [0], [1], [0, 0, 1, 1], [], []>} : vector<1x4xf32>, vector<4x8xf32>, vector<1x8xf32> -> vector<1x8xf32>
    %c0_6 = arith.constant 0 : index
    %c0_7 = arith.constant 0 : index
    %6 = vector.load %arg3[%c0_6, %c0_7] : memref<1x8xf32, #tpu.memory_space<vmem>>, vector<1x8xf32>
    %7 = arith.addf %5, %6 : vector<1x8xf32>
    %cst_8 = arith.constant 0.000000e+00 : f32
    %8 = vector.broadcast %cst_8 : f32 to vector<1x8xf32>
    %9 = arith.maximumf %7, %8 : vector<1x8xf32>
    %c0_9 = arith.constant 0 : index
    %c0_10 = arith.constant 0 : index
    %10 = vector.load %arg4[%c0_9, %c0_10] : memref<8x4xf32, #tpu.memory_space<vmem>>, vector<8x4xf32>
    %cst_11 = arith.constant dense<0.000000e+00> : vector<1x4xf32>
    %11 = tpu.matmul %9, %10, %cst_11 {dimension_numbers = #tpu.dot_dimension_numbers<[1], [0], [0], [1], [0, 0, 1, 1], [], []>} : vector<1x8xf32>, vector<8x4xf32>, vector<1x4xf32> -> vector<1x4xf32>
    %c0_12 = arith.constant 0 : index
    %c0_13 = arith.constant 0 : index
    %12 = vector.load %arg5[%c0_12, %c0_13] : memref<1x4xf32, #tpu.memory_space<vmem>>, vector<1x4xf32>
    %13 = arith.addf %11, %12 : vector<1x4xf32>
    %cst_14 = arith.constant 3.000000e+00 : f32
    %14 = vector.broadcast %cst_14 : f32 to vector<1x4xf32>
    %15 = arith.addf %13, %14 : vector<1x4xf32>
    %cst_15 = arith.constant 0.166666672 : f32
    %16 = vector.broadcast %cst_15 : f32 to vector<1x4xf32>
    %17 = arith.mulf %15, %16 : vector<1x4xf32>
    %cst_16 = arith.constant 0.000000e+00 : f32
    %cst_17 = arith.constant 1.000000e+00 : f32
    %18 = vector.broadcast %cst_16 : f32 to vector<1x4xf32>
    %19 = arith.maximumf %18, %17 : vector<1x4xf32>
    %20 = vector.broadcast %cst_17 : f32 to vector<1x4xf32>
    %21 = arith.minimumf %20, %19 : vector<1x4xf32>
    %c0_18 = arith.constant 0 : index
    %c0_19 = arith.constant 0 : index
    %c0_20 = arith.constant 0 : index
    %22 = vector.load %arg1[%c0_18, %c0_19, %c0_20] : memref<1x4x256xf32, #tpu.memory_space<vmem>>, vector<1x4x256xf32>
    %23 = vector.shape_cast %21 : vector<1x4xf32> to vector<1x4x1xf32>
    %24 = vector.broadcast %23 : vector<1x4x1xf32> to vector<1x4x256xf32>
    %25 = arith.mulf %22, %24 : vector<1x4x256xf32>
    %c0_21 = arith.constant 0 : index
    %c0_22 = arith.constant 0 : index
    %c0_23 = arith.constant 0 : index
    %26 = vector.load %arg6[%c0_21, %c0_22, %c0_23] : memref<1x4x256xf32, #tpu.memory_space<vmem>>, vector<1x4x256xf32>
    tpu.vector_store %arg6[%c0_21, %c0_22, %c0_23], %25 {strides = array<i32>} : memref<1x4x256xf32, #tpu.memory_space<vmem>>, vector<1x4x256xf32>,
    return
  }
  func.func @transform_0(%arg0: i32) -> (i32, i32, i32) {
    %c0_i32 = arith.constant 0 : i32
    %c0_i32_0 = arith.constant 0 : i32
    %c0_i32_1 = arith.constant 0 : i32
    return %arg0, %c0_i32, %c0_i32_0 : i32, i32, i32
  }
  func.func @transform_1(%arg0: i32) -> (i32, i32) {
    %c0_i32 = arith.constant 0 : i32
    %c0_i32_0 = arith.constant 0 : i32
    %c0_i32_1 = arith.constant 0 : i32
    return %c0_i32, %c0_i32_0 : i32, i32
  }
  func.func @transform_2(%arg0: i32) -> (i32, i32) {
    %c0_i32 = arith.constant 0 : i32
    %c0_i32_0 = arith.constant 0 : i32
    %c0_i32_1 = arith.constant 0 : i32
    return %c0_i32, %c0_i32_0 : i32, i32
  }
  func.func @transform_3(%arg0: i32) -> (i32, i32) {
    %c0_i32 = arith.constant 0 : i32
    %c0_i32_0 = arith.constant 0 : i32
    %c0_i32_1 = arith.constant 0 : i32
    return %c0_i32, %c0_i32_0 : i32, i32
  }
  func.func @transform_4(%arg0: i32) -> (i32, i32) {
    %c0_i32 = arith.constant 0 : i32
    %c0_i32_0 = arith.constant 0 : i32
    %c0_i32_1 = arith.constant 0 : i32
    return %c0_i32, %c0_i32_0 : i32, i32
  }
  func.func @transform_5(%arg0: i32) -> (i32, i32, i32) {
    %c0_i32 = arith.constant 0 : i32
    %c0_i32_0 = arith.constant 0 : i32
    %c0_i32_1 = arith.constant 0 : i32
    return %arg0, %c0_i32, %c0_i32_0 : i32, i32, i32
  }
}

</mosaic_0001>

<llo_original>
// kernel: squeeze_excitation.1
$region0: #{squeeze_excitation.1}
  #allocation0 [shape = 'u32[]', space=smem, size = 0x4, offset = 0x4, fixed_abs, tag = 'smem constant byte address 0x4 - core index']
  #allocation1 [shape = 'u32[72,128]{1,0:T(1,128)}', space=vmem, size = 0x9000, scoped, tag = 'internal scratch']
  %s0 = inlined_call_operand.vmem [shape: f32[2,4,256], index: 0, kind: input, shape index: {}]
  %s1 = inlined_call_operand.vmem [shape: f32[4,8], index: 1, kind: input, shape index: {}]
  %s2 = inlined_call_operand.vmem [shape: f32[1,8], index: 2, kind: input, shape index: {}]
  %s3 = inlined_call_operand.vmem [shape: f32[8,4], index: 3, kind: input, shape index: {}]
  %s4 = inlined_call_operand.vmem [shape: f32[1,4], index: 4, kind: input, shape index: {}]
  %s5 = inlined_call_operand.vmem [shape: f32[2,4,256], index: 5, kind: output, shape index: {}]
  %s6 = sld [smem:[#allocation0]]
  $region53: #{squeeze_excitation.1} parent=0
    _
  %s8 = ssub.s32 1, %s6
  %s9 = scalar_select 0, %s8, %s6
  loop: start=0, step=1, limit=4
  $region2: #{squeeze_excitation.1} parent=0 // loop_pre_header
    _
  $region3: #{squeeze_excitation.1} parent=0 // loop_header
    %s11 = sphi 0, %s15
    %p12 = scmp.ge.s32.totalorder %s11, 4
    %s21 = sphi 0, %s23
    %s24 = sphi 0, %s21
    %s25 = sphi 0, %s24
    %s41 = sphi 0, %s25
    %s45 = sphi 0, %s45
    %s47 = sphi 0, %s45
    %s48 = sphi 0, %s47
    %s62 = sphi 0, %s48
    %s66 = sphi 0, %s66
    %s68 = sphi 0, %s66
    %s69 = sphi 0, %s68
    %s83 = sphi 0, %s69
    %s87 = sphi 0, %s87
    %s89 = sphi 0, %s87
    %s90 = sphi 0, %s89
    %s104 = sphi 0, %s90
    %s108 = sphi 0, %s108
    %s110 = sphi 0, %s108
    %s111 = sphi 0, %s110
    %s125 = sphi 0, %s111
    %s131 = sphi 0, %s133
    %s134 = sphi 0, %s131
    %s135 = sphi 0, %s134
    %s151 = sphi 0, %s135
  $region4: #{squeeze_excitation.1} parent=0 // loop_header_branch
    %14 = sbr.rel (%p12) target = $region8
  $region5: #{squeeze_excitation.1} parent=0 // loop_body
    %s16 = ssub.s32 %s11, 1
    %s17 = ssub.s32 %s11, 2
    %s18 = sadd.s32 %s11, 1
    %s19 = ssub.s32 %s11, %s18
    %p20 = scmp.eq.s32.totalorder %s19, 0
    %s22 = sadd.s32 %s21, 1
    %s23 = scalar_select %p20, %s21, %s22
    %p26 = pneg %p20
    %p27 = scmp.eq.s32.totalorder %s11, 1
    %p28 = por %p26, %p27
    %p29 = scmp.ne.s32.totalorder %s21, %s24
    %p30 = scmp.eq.s32.totalorder %s11, 0
    %p31 = por %p29, %p30
    %p32 = scmp.ne.s32.totalorder %s21, %s24
    %p33 = scmp.eq.s32.totalorder %s16, 1
    %p34 = por %p32, %p33
    %p35 = scmp.ne.s32.totalorder %s24, %s25
    %p36 = scmp.eq.s32.totalorder %s16, 0
    %p37 = por %p35, %p36
    %p38 = scmp.ne.s32.totalorder %s24, %s25
    %p39 = scmp.eq.s32.totalorder %s17, 1
    %p40 = por %p38, %p39
    %p42 = scmp.ne.s32.totalorder %s25, %s41
    %p43 = scmp.eq.s32.totalorder %s17, 0
    %p44 = por %p42, %p43
    %s46 = sadd.s32 %s45, 1
    %p49 = scmp.eq.s32.totalorder %s11, 1
    %p50 = scmp.ne.s32.totalorder %s45, %s47
    %p51 = scmp.eq.s32.totalorder %s11, 0
    %p52 = por %p50, %p51
    %p53 = scmp.ne.s32.totalorder %s45, %s47
    %p54 = scmp.eq.s32.totalorder %s16, 1
    %p55 = por %p53, %p54
    %p56 = scmp.ne.s32.totalorder %s47, %s48
    %p57 = scmp.eq.s32.totalorder %s16, 0
    %p58 = por %p56, %p57
    %p59 = scmp.ne.s32.totalorder %s47, %s48
    %p60 = scmp.eq.s32.totalorder %s17, 1
    %p61 = por %p59, %p60
    %p63 = scmp.ne.s32.totalorder %s48, %s62
    %p64 = scmp.eq.s32.totalorder %s17, 0
    %p65 = por %p63, %p64
    %s67 = sadd.s32 %s66, 1
    %p70 = scmp.eq.s32.totalorder %s11, 1
    %p71 = scmp.ne.s32.totalorder %s66, %s68
    %p72 = scmp.eq.s32.totalorder %s11, 0
    %p73 = por %p71, %p72
    %p74 = scmp.ne.s32.totalorder %s66, %s68
    %p75 = scmp.eq.s32.totalorder %s16, 1
    %p76 = por %p74, %p75
    %p77 = scmp.ne.s32.totalorder %s68, %s69
    %p78 = scmp.eq.s32.totalorder %s16, 0
    %p79 = por %p77, %p78
    %p80 = scmp.ne.s32.totalorder %s68, %s69
    %p81 = scmp.eq.s32.totalorder %s17, 1
    %p82 = por %p80, %p81
    %p84 = scmp.ne.s32.totalorder %s69, %s83
    %p85 = scmp.eq.s32.totalorder %s17, 0
    %p86 = por %p84, %p85
    %s88 = sadd.s32 %s87, 1
    %p91 = scmp.eq.s32.totalorder %s11, 1
    %p92 = scmp.ne.s32.totalorder %s87, %s89
    %p93 = scmp.eq.s32.totalorder %s11, 0
    %p94 = por %p92, %p93
    %p95 = scmp.ne.s32.totalorder %s87, %s89
    %p96 = scmp.eq.s32.totalorder %s16, 1
    %p97 = por %p95, %p96
    %p98 = scmp.ne.s32.totalorder %s89, %s90
    %p99 = scmp.eq.s32.totalorder %s16, 0
    %p100 = por %p98, %p99
    %p101 = scmp.ne.s32.totalorder %s89, %s90
    %p102 = scmp.eq.s32.totalorder %s17, 1
    %p103 = por %p101, %p102
    %p105 = scmp.ne.s32.totalorder %s90, %s104
    %p106 = scmp.eq.s32.totalorder %s17, 0
    %p107 = por %p105, %p106
    %s109 = sadd.s32 %s108, 1
    %p112 = scmp.eq.s32.totalorder %s11, 1
    %p113 = scmp.ne.s32.totalorder %s108, %s110
    %p114 = scmp.eq.s32.totalorder %s11, 0
    %p115 = por %p113, %p114
    %p116 = scmp.ne.s32.totalorder %s108, %s110
    %p117 = scmp.eq.s32.totalorder %s16, 1
    %p118 = por %p116, %p117
    %p119 = scmp.ne.s32.totalorder %s110, %s111
    %p120 = scmp.eq.s32.totalorder %s16, 0
    %p121 = por %p119, %p120
    %p122 = scmp.ne.s32.totalorder %s110, %s111
    %p123 = scmp.eq.s32.totalorder %s17, 1
    %p124 = por %p122, %p123
    %p126 = scmp.ne.s32.totalorder %s111, %s125
    %p127 = scmp.eq.s32.totalorder %s17, 0
    %p128 = por %p126, %p127
    %s129 = ssub.s32 %s11, %s18
    %p130 = scmp.eq.s32.totalorder %s129, 0
    %s132 = sadd.s32 %s131, 1
    %s133 = scalar_select %p130, %s131, %s132
    %p136 = pneg %p130
    %p137 = scmp.eq.s32.totalorder %s11, 1
    %p138 = por %p136, %p137
    %p139 = scmp.ne.s32.totalorder %s131, %s134
    %p140 = scmp.eq.s32.totalorder %s11, 0
    %p141 = por %p139, %p140
    %p142 = scmp.ne.s32.totalorder %s131, %s134
    %p143 = scmp.eq.s32.totalorder %s16, 1
    %p144 = por %p142, %p143
    %p145 = scmp.ne.s32.totalorder %s134, %s135
    %p146 = scmp.eq.s32.totalorder %s16, 0
    %p147 = por %p145, %p146
    %p148 = scmp.ne.s32.totalorder %s134, %s135
    %p149 = scmp.eq.s32.totalorder %s17, 1
    %p150 = por %p148, %p149
    %p152 = scmp.ne.s32.totalorder %s135, %s151
    %p153 = scmp.eq.s32.totalorder %s17, 0
    %p154 = por %p152, %p153
    %p155 = scmp.le.s32.totalorder 1, %s11
    %p156 = scmp.lt.s32.totalorder %s11, 3
    %p157 = pnand %p155, %p156
    %p158 = pneg %p157
    // Predicated region
    $region9: #{squeeze_excitation.1} parent=5 // pred_check
      _
    $region10: #{squeeze_excitation.1} parent=5 // pred_check_branch
      %160 = sbr.rel (%p157) target = $region12
    $region11: #{squeeze_excitation.1} parent=5 // pred_region
      %s161 = ssub.s32 %s11, 1
      // Predicated region
      $region13: #{squeeze_excitation.1} parent=11 // pred_check
        %p162 = pneg %p58
      $region14: #{squeeze_excitation.1} parent=11 // pred_check_branch
        %164 = sbr.rel (%p162) target = $region16
      $region15: #{squeeze_excitation.1} parent=11 // pred_region
        _
      $region16: #{squeeze_excitation.1} parent=11 // pred_fallthru
        _
      // Predicated region
      $region17: #{squeeze_excitation.1} parent=11 // pred_check
        %p165 = pneg %p79
      $region18: #{squeeze_excitation.1} parent=11 // pred_check_branch
        %167 = sbr.rel (%p165) target = $region20
      $region19: #{squeeze_excitation.1} parent=11 // pred_region
        _
      $region20: #{squeeze_excitation.1} parent=11 // pred_fallthru
        _
      // Predicated region
      $region21: #{squeeze_excitation.1} parent=11 // pred_check
        %p168 = pneg %p100
      $region22: #{squeeze_excitation.1} parent=11 // pred_check_branch
        %170 = sbr.rel (%p168) target = $region24
      $region23: #{squeeze_excitation.1} parent=11 // pred_region
        _
      $region24: #{squeeze_excitation.1} parent=11 // pred_fallthru
        _
      // Predicated region
      $region25: #{squeeze_excitation.1} parent=11 // pred_check
        %p171 = pneg %p121
      $region26: #{squeeze_excitation.1} parent=11 // pred_check_branch
        %173 = sbr.rel (%p171) target = $region28
      $region27: #{squeeze_excitation.1} parent=11 // pred_region
        _
      $region28: #{squeeze_excitation.1} parent=11 // pred_fallthru
        _
    $region12: #{squeeze_excitation.1} parent=5 // pred_fallthru
      _
    %p174 = scmp.lt.s32.totalorder %s11, 2
    // Predicated region
    $region29: #{squeeze_excitation.1} parent=5 // pred_check
      %p175 = pneg %p174
    $region30: #{squeeze_excitation.1} parent=5 // pred_check_branch
      %177 = sbr.rel (%p175) target = $region32
    $region31: #{squeeze_excitation.1} parent=5 // pred_region
      // Predicated region
      $region33: #{squeeze_excitation.1} parent=31 // pred_check
        %p178 = pneg %p31
      $region34: #{squeeze_excitation.1} parent=31 // pred_check_branch
        %180 = sbr.rel (%p178) target = $region36
      $region35: #{squeeze_excitation.1} parent=31 // pred_region
        %p181 = scmp.lt.s32.totalorder %s11, 1
        %s182 = scalar_select %p181, %s11, 1
        %s183 = smul.addr %s182, 2
        %s184 = smul.addr %s183, 4
        %s185 = scalar_lea.vmem %s0, %s184
      $region36: #{squeeze_excitation.1} parent=31 // pred_fallthru
        _
    $region32: #{squeeze_excitation.1} parent=5 // pred_fallthru
      _
    %p186 = scmp.le.s32.totalorder 1, %s11
    %p187 = scmp.lt.s32.totalorder %s11, 3
    %p188 = pnand %p186, %p187
    %p189 = pneg %p188
    // Predicated region
    $region37: #{squeeze_excitation.1} parent=5 // pred_check
      _
    $region38: #{squeeze_excitation.1} parent=5 // pred_check_branch
      %191 = sbr.rel (%p188) target = $region40
    $region39: #{squeeze_excitation.1} parent=5 // pred_region
      %s192 = ssub.s32 %s11, 1
      %p193 = scmp.lt.s32.totalorder %s16, 1
      %s194 = scalar_select %p193, %s16, 1
      %s195 = smul.addr %s194, 2
      %s196 = smul.addr %s195, 4
      %s197 = scalar_lea.vmem %s0, %s196
      %p198 = pneg %p37
      %p199 = pneg %p34
      %p200 = pneg %p58
      %p201 = pneg %p55
      %p202 = pneg %p79
      %p203 = pneg %p76
      %p204 = pneg %p100
      %p205 = pneg %p97
      %p206 = pneg %p121
      %p207 = pneg %p118
      %p208 = pneg %p147
      %p209 = pneg %p144
      %p210 = scmp.lt.s32.totalorder %s16, 1
      %s211 = scalar_select %p210, %s16, 1
      %s212 = smul.addr %s211, 2
      %s213 = smul.addr %s212, 4
      %s214 = scalar_lea.vmem %s5, %s213
      %p215 = scmp.lt.s32.totalorder %s16, 1
      %s216 = scalar_select %p215, %s16, 1
      %s217 = smul.addr %s216, 2
      %s218 = smul.addr %s217, 4
      %s219 = scalar_lea.vmem %s0, %s218
      %p220 = scmp.lt.s32.totalorder %s16, 1
      %s221 = scalar_select %p220, %s16, 1
      %s222 = smul.addr %s221, 2
      %s223 = smul.addr %s222, 4
      %s224 = scalar_lea.vmem %s5, %s223
      %v225 = vld [vmem:[%s219] sm:$0xff]
      %227 = vst [vmem:[#allocation1] ss:$2 sm:$0xff] %v225
      %v228 = vld.sshfl [vmem:[#allocation1] sm:$0xff pattern:$0x75316420]
      %v229 = vld.sshfl [vmem:[#allocation1 + $0x8] sm:$0xff pattern:$0x75316420]
      %vm232 = vcmask 1043456
      %v233 = vsel %vm232, %v228, 0.0
      %v234 = vsel %vm232, %v229, 0.0
      %v235 = vadd.f32 %v233, %v234
      %236 = vadd.xlane.f32.xlu0 %v235
      %v237 = vpop.xlane.xlu0 %236
      %v238 = vmul.f32 %v237, 0.00390625
      %v239 = vld [vmem:[%s1] sm:$0xf]
      %v240 = vld [vmem:[%s2] sm:$0x1]
      %v242 = vlaneseq
      %v243 = vand.u32 %v242, 127
      %v244 = vperm.slane %v238, %v243
      %vm245 = vcmask 31744
      %v246 = vsel %vm245, %v244, 0
      %v249 = vsel %vm232, %v239, 0
      %251 = vmatpush.msra.mxu0 0.0
      %252 = vmatpush.msra.mxu0 0.0
      %253 = vmatpush.msra.mxu0 0.0
      %254 = vmatpush.msra.mxu0 0.0
      %255 = vmatpush.msra.mxu0 0.0
      %256 = vmatpush.msra.mxu0 0.0
      %257 = vmatpush.msra.mxu0 0.0
      %258 = vmatpush.msra.mxu0 0.0
      %259 = vmatpush.msra.mxu0 0.0
      %260 = vmatpush.msra.mxu0 0.0
      %261 = vmatpush.msra.mxu0 0.0
      %262 = vmatpush.msra.mxu0 0.0
      %263 = vmatpush.msra.mxu0 0.0
      %264 = vmatpush.msra.mxu0 0.0
      %265 = vmatpush.msra.mxu0 0.0
      %266 = vmatpush.msra.mxu0 %v249
      %267 = vmatmul.f32.gmra.mxu0 %v246
      %v268 = vpop.f32.mrf.mxu0
      %v269 = vadd.f32 %v240, %v268
      %270 = vdwg.mxu0
      %v271 = vmax.f32 %v269, 0.0
      %v272 = vld [vmem:[%s3] sm:$0xff]
      %v273 = vld [vmem:[%s4] sm:$0x1]
      %vm274 = vcmask 64512
      %v276 = vsel %vm274, %v271, 0
      %278 = vmatpush.msra.mxu0 0.0
      %279 = vmatpush.msra.mxu0 0.0
      %280 = vmatpush.msra.mxu0 0.0
      %281 = vmatpush.msra.mxu0 0.0
      %282 = vmatpush.msra.mxu0 0.0
      %283 = vmatpush.msra.mxu0 0.0
      %284 = vmatpush.msra.mxu0 0.0
      %285 = vmatpush.msra.mxu0 0.0
      %286 = vmatpush.msra.mxu0 0.0
      %287 = vmatpush.msra.mxu0 0.0
      %288 = vmatpush.msra.mxu0 0.0
      %289 = vmatpush.msra.mxu0 0.0
      %290 = vmatpush.msra.mxu0 0.0
      %291 = vmatpush.msra.mxu0 0.0
      %292 = vmatpush.msra.mxu0 0.0
      %293 = vmatpush.msra.mxu0 %v272
      %294 = vmatmul.f32.gmra.mxu0 %v276
      %v295 = vpop.f32.mrf.mxu0
      %v296 = vadd.f32 %v273, %v295
      %297 = vdwg.mxu0
      %v298 = vadd.f32 %v296, 3.0
      %v299 = vmul.f32 %v298, 0.16666667
      %v300 = vmax.f32 %v299, 0.0
      %v301 = vmin.f32 %v300, 1.0
      %v302 = vperm.slane %v301, 0
      %v303 = vlaneseq
      %v304 = vshrl.u32 %v303, 7
      %306 = vset.pattern.permute.xlu0 %v304
      %307 = vperm.xlu0 %306, %v302
      %v308 = vpop.permute.xlu0 %307
      %v311 = vunpack.c.l.s4 839922192
      %v312 = vunpack.c.0.s8 %v311
      %v313 = vperm.slane %v308, %v312
      %v315 = vmul.f32 %v225, %v313
      %316 = vst [vmem:[%s224] sm:$0xff] %v315
      %p317 = scmp.lt.s32.totalorder %s16, 1
      %s318 = scalar_select %p317, %s16, 1
      %s319 = smul.addr %s318, 2
      %s320 = smul.addr %s319, 4
      %s321 = scalar_lea.vmem %s5, %s320
      // Predicated region
      $region41: #{squeeze_excitation.1} parent=39 // pred_check
        %p322 = pneg %p144
      $region42: #{squeeze_excitation.1} parent=39 // pred_check_branch
        %324 = sbr.rel (%p322) target = $region44
      $region43: #{squeeze_excitation.1} parent=39 // pred_region
        _
      $region44: #{squeeze_excitation.1} parent=39 // pred_fallthru
        _
    $region40: #{squeeze_excitation.1} parent=5 // pred_fallthru
      _
    %p325 = scmp.le.s32.totalorder 2, %s11
    // Predicated region
    $region45: #{squeeze_excitation.1} parent=5 // pred_check
      %p326 = pneg %p325
    $region46: #{squeeze_excitation.1} parent=5 // pred_check_branch
      %328 = sbr.rel (%p326) target = $region48
    $region47: #{squeeze_excitation.1} parent=5 // pred_region
      %s329 = ssub.s32 %s11, 2
      // Predicated region
      $region49: #{squeeze_excitation.1} parent=47 // pred_check
        %p330 = pneg %p150
      $region50: #{squeeze_excitation.1} parent=47 // pred_check_branch
        %332 = sbr.rel (%p330) target = $region52
      $region51: #{squeeze_excitation.1} parent=47 // pred_region
        %p333 = scmp.lt.s32.totalorder %s17, 1
        %s334 = scalar_select %p333, %s17, 1
        %s335 = smul.addr %s334, 2
        %s336 = smul.addr %s335, 4
        %s337 = scalar_lea.vmem %s5, %s336
      $region52: #{squeeze_excitation.1} parent=47 // pred_fallthru
        _
    $region48: #{squeeze_excitation.1} parent=5 // pred_fallthru
      _
  $region6: #{squeeze_excitation.1} parent=0 // loop_footer
    %s15 = sadd.s32 1, %s11
  $region7: #{squeeze_excitation.1} parent=0 // loop_footer_branch
    %10 = sbr.rel target = $region3
  $region8: #{squeeze_excitation.1} parent=0 // loop_exit
    _

</llo_original>
